<compile_context>
chip_gen: v5e
topology: v5e:2x2
jax: 0.10.0
libtpu: 0.0.40
codegen_flags: <defaults>
</compile_context>

<pallas_src>
import jax
import jax.numpy as jnp
from jax.experimental import pallas as pl
from jax.experimental.pallas import tpu as pltpu

BN_EPS = 1e-5


# --------------------------------------------------------------------------- #
# Kernel
# --------------------------------------------------------------------------- #
def _mlp_kernel(x_ref, w1_ref, b1_ref, w2_ref, b2_ref, w3_ref, b3_ref,
                w4_ref, b4_ref, o_ref):
    """One batch tile. Layout: activations are [features, batch_tile]."""

    def layer(h, w_ref, b_ref):
        # Linear with BN pre-folded into w/b; matmul operands may be bf16,
        # accumulation and all elementwise math stay in f32.
        y = jnp.dot(w_ref[...], h.astype(w_ref.dtype),
                    preferred_element_type=jnp.float32)
        return jnp.maximum(y + b_ref[...], 0.0)            # bias + ReLU (VPU)

    h = x_ref[...]                                          # (4,  TM)
    h = layer(h, w1_ref, b1_ref)                            # (64, TM)
    h = layer(h, w2_ref, b2_ref)                            # (32, TM)
    h = layer(h, w3_ref, b3_ref)                            # (16, TM)
    # Final Linear(16 -> 1): VPU multiply + sublane reduce (XLU), producing a
    # lane-dense (1, TM) store instead of an MXU matmul with a 1-wide output.
    out = jnp.sum(h * w4_ref[...], axis=0, keepdims=True) + b4_ref[...]
    o_ref[...] = out.astype(o_ref.dtype)


# --------------------------------------------------------------------------- #
# Host-side helpers (plain JAX)
# --------------------------------------------------------------------------- #
def fold_batchnorm(params):
    """Fold eval-mode BatchNorm1d into the preceding Linear (computed in f32)."""
    folded = []
    for (w, b, g, be, m, v) in params:
        scale = g * jax.lax.rsqrt(v + BN_EPS)               # (out,)
        w_eff = w * scale[:, None]                          # (out, in)
        b_eff = (b - m) * scale + be                        # (out,)
        folded.append((w_eff, b_eff))
    return folded


def pv_self_consumption_forward(x, params, final_params, *,
                                matmul_dtype=jnp.float32, tile_batch=2048):
    """x: [batch, input_size] float32 -> [batch, 1] float32 (eval-mode forward).

    Dropout is identity and BatchNorm uses running statistics (inference mode).
    `tile_batch` is the per-grid-step batch tile (lanes); default 2048 keeps the
    double-buffered tiles comfortably inside v7x's 64 MiB VMEM.
    """
    # TODO(synk): training-mode dropout / batch-statistics BN not reproduced.
    batch, in_features = x.shape

    # --- fold BN into the linears (f32, on host) ---
    folded = fold_batchnorm(params)
    w_list = [w_eff.astype(matmul_dtype) for (w_eff, _) in folded]
    b_list = [b_eff.reshape(-1, 1).astype(jnp.float32) for (_, b_eff) in folded]
    w4, b4 = final_params
    w4_col = w4.reshape(-1, 1).astype(jnp.float32)          # (16, 1)
    b4_s = b4.reshape(1, 1).astype(jnp.float32)             # (1, 1)

    # --- batch tiling: batch lives on the 128-lane axis ---
    tile_batch = max(128, (int(tile_batch) // 128) * 128)   # multiple of 128
    tm = min(tile_batch, max(128, pl.next_power_of_2(batch)))
    n_tiles = pl.cdiv(batch, tm)
    padded = n_tiles * tm

    # Transposed (feature-major) input, zero-padded on the batch/lane axis.
    xt = jnp.zeros((in_features, padded), matmul_dtype)
    xt = xt.at[:, :batch].set(x.T.astype(matmul_dtype))

    def resident(arr):               # weights/biases: same block every grid step
        return pl.BlockSpec(arr.shape, lambda i: (0, 0))

    flat_args = [xt]
    in_specs = [pl.BlockSpec((in_features, tm), lambda i: (0, i))]
    for w_eff, b_eff in zip(w_list, b_list):
        flat_args += [w_eff, b_eff]
        in_specs += [resident(w_eff), resident(b_eff)]
    flat_args += [w4_col, b4_s]
    in_specs += [resident(w4_col), resident(b4_s)]

    out_t = pl.pallas_call(
        _mlp_kernel,
        out_shape=jax.ShapeDtypeStruct((1, padded), jnp.float32),
        grid=(n_tiles,),
        in_specs=in_specs,
        out_specs=pl.BlockSpec((1, tm), lambda i: (0, i)),
        compiler_params=pltpu.CompilerParams(
            dimension_semantics=("parallel",)),
    )(*flat_args)

    return out_t[:, :batch].T                               # (batch, 1)


# --------------------------------------------------------------------------- #
# Parameter init + pure-JAX references
# --------------------------------------------------------------------------- #
def init_params(key, input_size=4, hidden_sizes=(64, 32, 16)):
    """Deterministic params mirroring the PyTorch module's shapes.

    Linear weights use PyTorch's [out_features, in_features] convention.
    BatchNorm params/stats are 1-D [out_features] vectors.
    """
    params = []
    prev = input_size
    for h in hidden_sizes:
        key, kw, kb, kg, kbe, km, kv = jax.random.split(key, 7)
        bound = 1.0 / (prev ** 0.5)
        w = jax.random.uniform(kw, (h, prev), jnp.float32, -bound, bound)
        b = jax.random.uniform(kb, (h,), jnp.float32, -bound, bound)
        g = 1.0 + 0.1 * jax.random.normal(kg, (h,), jnp.float32)
        be = 0.1 * jax.random.normal(kbe, (h,), jnp.float32)
        m = 0.1 * jax.random.normal(km, (h,), jnp.float32)
        v = 1.0 + 0.1 * jax.random.uniform(kv, (h,), jnp.float32)
        params.append((w, b, g, be, m, v))
        prev = h
    key, kw, kb = jax.random.split(key, 3)
    bound = 1.0 / (prev ** 0.5)
    w4 = jax.random.uniform(kw, (1, prev), jnp.float32, -bound, bound)
    b4 = jax.random.uniform(kb, (1,), jnp.float32, -bound, bound)
    return params, (w4, b4)


def reference_forward(x, params, final_params):
    """Pure-JAX eval-mode forward matching the PyTorch module (BN unfolded)."""
    h = x.astype(jnp.float32)
    for (w, b, g, be, m, v) in params:
        h = h @ w.T + b
        h = g * (h - m) * jax.lax.rsqrt(v + BN_EPS) + be
        h = jnp.maximum(h, 0.0)
    w4, b4 = final_params
    return h @ w4.T + b4


def folded_reference_forward(x, params, final_params):
    """Pure-JAX forward using the same BN-folded weights as the kernel."""
    h = x.astype(jnp.float32)
    for (w_eff, b_eff) in fold_batchnorm(params):
        h = jnp.maximum(h @ w_eff.T + b_eff, 0.0)
    w4, b4 = final_params
    return h @ w4.T + b4


# --------------------------------------------------------------------------- #
# Demo / self-check
# --------------------------------------------------------------------------- #
if __name__ == "__main__":
    key = jax.random.PRNGKey(0)
    key, k_x, k_x2, k_p = jax.random.split(key, 4)

    batch, input_size = 8, 4
    x = jax.random.normal(k_x, (batch, input_size), jnp.float32)
    params, final_params = init_params(k_p, input_size=input_size,
                                       hidden_sizes=(64, 32, 16))

    ref = reference_forward(x, params, final_params)
    fref = folded_reference_forward(x, params, final_params)

    # f32 path (single 128-lane tile for this tiny batch).
    out = jax.block_until_ready(
        pv_self_consumption_forward(x, params, final_params))
    assert out.shape == (batch, 1), out.shape
    # Tight check vs. an op-order-equivalent pure-JAX fold ...
    assert jnp.allclose(out, fref, atol=1e-4, rtol=1e-4), (out, fref)
    # ... and a looser check vs. the unfolded module spec (the BN fold
    # reassociates f32 matmul rounding, so exact bitwise agreement isn't expected).
    assert jnp.allclose(out, ref, atol=1e-2, rtol=1e-2), (out, ref)

    # Multi-tile grid + non-multiple batch (exercises padding / remainder path).
    batch2 = 300
    x2 = jax.random.normal(k_x2, (batch2, input_size), jnp.float32)
    out2 = jax.block_until_ready(
        pv_self_consumption_forward(x2, params, final_params, tile_batch=128))
    assert out2.shape == (batch2, 1), out2.shape
    fref2 = folded_reference_forward(x2, params, final_params)
    assert jnp.allclose(out2, fref2, atol=1e-4, rtol=1e-4), (out2, fref2)

    # bf16 matmul-operand path (v6e/v7x DMA win); accumulation stays f32.
    out_bf16 = jax.block_until_ready(
        pv_self_consumption_forward(x, params, final_params,
                                    matmul_dtype=jnp.bfloat16))
    assert jnp.allclose(out_bf16, fref, atol=5e-2, rtol=5e-2), (out_bf16, fref)

    print("KERNEL_OK")
</pallas_src>

<mosaic_0001>
module attributes {stable_mosaic.version = 11 : i64} {
  func.func @_mlp_kernel(%arg0: i32, %arg1: memref<4x128xf32, #tpu.memory_space<vmem>>, %arg2: memref<64x4xf32, #tpu.memory_space<vmem>>, %arg3: memref<64x1xf32, #tpu.memory_space<vmem>>, %arg4: memref<32x64xf32, #tpu.memory_space<vmem>>, %arg5: memref<32x1xf32, #tpu.memory_space<vmem>>, %arg6: memref<16x32xf32, #tpu.memory_space<vmem>>, %arg7: memref<16x1xf32, #tpu.memory_space<vmem>>, %arg8: memref<16x1xf32, #tpu.memory_space<vmem>>, %arg9: memref<1x1xf32, #tpu.memory_space<vmem>>, %arg10: memref<1x128xf32, #tpu.memory_space<vmem>>) attributes {dimension_semantics = [#tpu.dimension_semantics<parallel>], iteration_bounds = array<i64: 1>, scalar_prefetch = 0 : i64, scratch_operands = 0 : i64, tpu.core_type = #tpu.core_type<tc>, window_params = [{transform_indices = @transform_0, window_bounds = array<i64: 4, 128>}, {pipeline_mode = #tpu.pipeline_mode<synchronous>, transform_indices = @transform_1, window_bounds = array<i64: 64, 4>}, {pipeline_mode = #tpu.pipeline_mode<synchronous>, transform_indices = @transform_2, window_bounds = array<i64: 64, 1>}, {pipeline_mode = #tpu.pipeline_mode<synchronous>, transform_indices = @transform_3, window_bounds = array<i64: 32, 64>}, {pipeline_mode = #tpu.pipeline_mode<synchronous>, transform_indices = @transform_4, window_bounds = array<i64: 32, 1>}, {pipeline_mode = #tpu.pipeline_mode<synchronous>, transform_indices = @transform_5, window_bounds = array<i64: 16, 32>}, {pipeline_mode = #tpu.pipeline_mode<synchronous>, transform_indices = @transform_6, window_bounds = array<i64: 16, 1>}, {pipeline_mode = #tpu.pipeline_mode<synchronous>, transform_indices = @transform_7, window_bounds = array<i64: 16, 1>}, {pipeline_mode = #tpu.pipeline_mode<synchronous>, transform_indices = @transform_8, window_bounds = array<i64: 1, 1>}, {transform_indices = @transform_9, window_bounds = array<i64: 1, 128>}]} {
    %c0 = arith.constant 0 : index
    %c0_0 = arith.constant 0 : index
    %0 = vector.load %arg1[%c0, %c0_0] : memref<4x128xf32, #tpu.memory_space<vmem>>, vector<4x128xf32>
    %c0_1 = arith.constant 0 : index
    %c0_2 = arith.constant 0 : index
    %1 = vector.load %arg2[%c0_1, %c0_2] : memref<64x4xf32, #tpu.memory_space<vmem>>, vector<64x4xf32>
    %cst = arith.constant dense<0.000000e+00> : vector<64x128xf32>
    %2 = tpu.matmul %1, %0, %cst {dimension_numbers = #tpu.dot_dimension_numbers<[1], [0], [0], [1], [0, 0, 1, 1], [], []>} : vector<64x4xf32>, vector<4x128xf32>, vector<64x128xf32> -> vector<64x128xf32>
    %c0_3 = arith.constant 0 : index
    %c0_4 = arith.constant 0 : index
    %3 = vector.load %arg3[%c0_3, %c0_4] : memref<64x1xf32, #tpu.memory_space<vmem>>, vector<64x1xf32>
    %4 = vector.broadcast %3 : vector<64x1xf32> to vector<64x128xf32>
    %5 = arith.addf %2, %4 : vector<64x128xf32>
    %cst_5 = arith.constant 0.000000e+00 : f32
    %6 = vector.broadcast %cst_5 : f32 to vector<64x128xf32>
    %7 = arith.maximumf %5, %6 : vector<64x128xf32>
    %c0_6 = arith.constant 0 : index
    %c0_7 = arith.constant 0 : index
    %8 = vector.load %arg4[%c0_6, %c0_7] : memref<32x64xf32, #tpu.memory_space<vmem>>, vector<32x64xf32>
    %cst_8 = arith.constant dense<0.000000e+00> : vector<32x128xf32>
    %9 = tpu.matmul %8, %7, %cst_8 {dimension_numbers = #tpu.dot_dimension_numbers<[1], [0], [0], [1], [0, 0, 1, 1], [], []>} : vector<32x64xf32>, vector<64x128xf32>, vector<32x128xf32> -> vector<32x128xf32>
    %c0_9 = arith.constant 0 : index
    %c0_10 = arith.constant 0 : index
    %10 = vector.load %arg5[%c0_9, %c0_10] : memref<32x1xf32, #tpu.memory_space<vmem>>, vector<32x1xf32>
    %11 = vector.broadcast %10 : vector<32x1xf32> to vector<32x128xf32>
    %12 = arith.addf %9, %11 : vector<32x128xf32>
    %cst_11 = arith.constant 0.000000e+00 : f32
    %13 = vector.broadcast %cst_11 : f32 to vector<32x128xf32>
    %14 = arith.maximumf %12, %13 : vector<32x128xf32>
    %c0_12 = arith.constant 0 : index
    %c0_13 = arith.constant 0 : index
    %15 = vector.load %arg6[%c0_12, %c0_13] : memref<16x32xf32, #tpu.memory_space<vmem>>, vector<16x32xf32>
    %cst_14 = arith.constant dense<0.000000e+00> : vector<16x128xf32>
    %16 = tpu.matmul %15, %14, %cst_14 {dimension_numbers = #tpu.dot_dimension_numbers<[1], [0], [0], [1], [0, 0, 1, 1], [], []>} : vector<16x32xf32>, vector<32x128xf32>, vector<16x128xf32> -> vector<16x128xf32>
    %c0_15 = arith.constant 0 : index
    %c0_16 = arith.constant 0 : index
    %17 = vector.load %arg7[%c0_15, %c0_16] : memref<16x1xf32, #tpu.memory_space<vmem>>, vector<16x1xf32>
    %18 = vector.broadcast %17 : vector<16x1xf32> to vector<16x128xf32>
    %19 = arith.addf %16, %18 : vector<16x128xf32>
    %cst_17 = arith.constant 0.000000e+00 : f32
    %20 = vector.broadcast %cst_17 : f32 to vector<16x128xf32>
    %21 = arith.maximumf %19, %20 : vector<16x128xf32>
    %c0_18 = arith.constant 0 : index
    %c0_19 = arith.constant 0 : index
    %22 = vector.load %arg8[%c0_18, %c0_19] : memref<16x1xf32, #tpu.memory_space<vmem>>, vector<16x1xf32>
    %23 = vector.broadcast %22 : vector<16x1xf32> to vector<16x128xf32>
    %24 = arith.mulf %21, %23 : vector<16x128xf32>
    %cst_20 = arith.constant dense<0.000000e+00> : vector<128xf32>
    %25 = vector.multi_reduction <add>, %24, %cst_20 [0] : vector<16x128xf32> to vector<128xf32>
    %26 = vector.shape_cast %25 : vector<128xf32> to vector<1x128xf32>
    %c0_21 = arith.constant 0 : index
    %c0_22 = arith.constant 0 : index
    %27 = vector.load %arg9[%c0_21, %c0_22] : memref<1x1xf32, #tpu.memory_space<vmem>>, vector<1x1xf32>
    %28 = vector.broadcast %27 : vector<1x1xf32> to vector<1x128xf32>
    %29 = arith.addf %26, %28 : vector<1x128xf32>
    %c0_23 = arith.constant 0 : index
    %c0_24 = arith.constant 0 : index
    %30 = vector.load %arg10[%c0_23, %c0_24] : memref<1x128xf32, #tpu.memory_space<vmem>>, vector<1x128xf32>
    tpu.vector_store %arg10[%c0_23, %c0_24], %29 {strides = array<i32>} : memref<1x128xf32, #tpu.memory_space<vmem>>, vector<1x128xf32>,
    return
  }
  func.func @transform_0(%arg0: i32) -> (i32, i32) {
    %c0_i32 = arith.constant 0 : i32
    %c0_i32_0 = arith.constant 0 : i32
    return %c0_i32, %arg0 : i32, i32
  }
  func.func @transform_1(%arg0: i32) -> (i32, i32) {
    %c0_i32 = arith.constant 0 : i32
    %c0_i32_0 = arith.constant 0 : i32
    %c0_i32_1 = arith.constant 0 : i32
    return %c0_i32, %c0_i32_0 : i32, i32
  }
  func.func @transform_2(%arg0: i32) -> (i32, i32) {
    %c0_i32 = arith.constant 0 : i32
    %c0_i32_0 = arith.constant 0 : i32
    %c0_i32_1 = arith.constant 0 : i32
    return %c0_i32, %c0_i32_0 : i32, i32
  }
  func.func @transform_3(%arg0: i32) -> (i32, i32) {
    %c0_i32 = arith.constant 0 : i32
    %c0_i32_0 = arith.constant 0 : i32
    %c0_i32_1 = arith.constant 0 : i32
    return %c0_i32, %c0_i32_0 : i32, i32
  }
  func.func @transform_4(%arg0: i32) -> (i32, i32) {
    %c0_i32 = arith.constant 0 : i32
    %c0_i32_0 = arith.constant 0 : i32
    %c0_i32_1 = arith.constant 0 : i32
    return %c0_i32, %c0_i32_0 : i32, i32
  }
  func.func @transform_5(%arg0: i32) -> (i32, i32) {
    %c0_i32 = arith.constant 0 : i32
    %c0_i32_0 = arith.constant 0 : i32
    %c0_i32_1 = arith.constant 0 : i32
    return %c0_i32, %c0_i32_0 : i32, i32
  }
  func.func @transform_6(%arg0: i32) -> (i32, i32) {
    %c0_i32 = arith.constant 0 : i32
    %c0_i32_0 = arith.constant 0 : i32
    %c0_i32_1 = arith.constant 0 : i32
    return %c0_i32, %c0_i32_0 : i32, i32
  }
  func.func @transform_7(%arg0: i32) -> (i32, i32) {
    %c0_i32 = arith.constant 0 : i32
    %c0_i32_0 = arith.constant 0 : i32
    %c0_i32_1 = arith.constant 0 : i32
    return %c0_i32, %c0_i32_0 : i32, i32
  }
  func.func @transform_8(%arg0: i32) -> (i32, i32) {
    %c0_i32 = arith.constant 0 : i32
    %c0_i32_0 = arith.constant 0 : i32
    %c0_i32_1 = arith.constant 0 : i32
    return %c0_i32, %c0_i32_0 : i32, i32
  }
  func.func @transform_9(%arg0: i32) -> (i32, i32) {
    %c0_i32 = arith.constant 0 : i32
    %c0_i32_0 = arith.constant 0 : i32
    return %c0_i32, %arg0 : i32, i32
  }
}

</mosaic_0001>

<llo_original>
// kernel: tpu_custom_call.1
$region0: #{tpu_custom_call.1}
  #allocation0 [shape = 'u32[]', space=smem, size = 0x4, offset = 0x4, fixed_abs, tag = 'smem constant byte address 0x4 - core index']
  #allocation1 [shape = 'u32[72,128]{1,0:T(1,128)}', space=vmem, size = 0x9000, scoped, tag = 'internal scratch']
  #allocation2 [shape = 'f32[1,1]{1,0:T(1,128)S(1)}', space=vmem, size = 0x200, scoped, tag = 'scoped memory for tpu_custom_call.1']
  %s0 = inlined_call_operand.vmem [shape: f32[4,128], index: 0, kind: input, shape index: {}]
  %s1 = inlined_call_operand.vmem [shape: f32[64,4], index: 1, kind: input, shape index: {}]
  %s2 = inlined_call_operand.vmem [shape: f32[64,1], index: 2, kind: input, shape index: {}]
  %s3 = inlined_call_operand.vmem [shape: f32[32,64], index: 3, kind: input, shape index: {}]
  %s4 = inlined_call_operand.vmem [shape: f32[32,1], index: 4, kind: input, shape index: {}]
  %s5 = inlined_call_operand.vmem [shape: f32[16,32], index: 5, kind: input, shape index: {}]
  %s6 = inlined_call_operand.vmem [shape: f32[16,1], index: 6, kind: input, shape index: {}]
  %s7 = inlined_call_operand.vmem [shape: f32[16,1], index: 7, kind: input, shape index: {}]
  %s8 = inlined_call_operand.<no memory space> [shape: f32[1,1], index: 8, kind: input, shape index: {}]
  %s9 = inlined_call_operand.hbm [shape: f32[1,128], index: 9, kind: output, shape index: {}]
  %s10 = sld [smem:[#allocation0]]
  $region46: #{tpu_custom_call.1} parent=0
    _
  %s12 = ssub.s32 1, %s10
  %s13 = scalar_select 0, %s12, %s10
  %v14 = vstv %s8
  %15 = vst [vmem:[#allocation2] sm:$0x1] %v14
  $region1: #{tpu_custom_call.1} parent=0
    #allocation3 [shape = 'u8[512]{0}', space=vmem, size = 0x400, scoped, tag = 'output window, operand 0, single buffered']
    #allocation4 [shape = 's32[1]{0}', space=sflag, size = 0x4, scoped, tag = 'scoped memory for tpu_custom_call.1']
    %16 = vsyncpa [#allocation4], 0
    // Predicated region
    $region2: #{tpu_custom_call.1} parent=1 // pred_check
      _
    $region3: #{tpu_custom_call.1} parent=1 // pred_check_branch
      %18 = sbr.rel (0) target = $region5
    $region4: #{tpu_custom_call.1} parent=1 // pred_region
      _
    $region5: #{tpu_custom_call.1} parent=1 // pred_fallthru
      _
    // Predicated region
    $region6: #{tpu_custom_call.1} parent=1 // pred_check
      _
    $region7: #{tpu_custom_call.1} parent=1 // pred_check_branch
      %20 = sbr.rel (0) target = $region9
    $region8: #{tpu_custom_call.1} parent=1 // pred_region
      _
    $region9: #{tpu_custom_call.1} parent=1 // pred_fallthru
      _
    // Predicated region
    $region10: #{tpu_custom_call.1} parent=1 // pred_check
      _
    $region11: #{tpu_custom_call.1} parent=1 // pred_check_branch
      %22 = sbr.rel (0) target = $region13
    $region12: #{tpu_custom_call.1} parent=1 // pred_region
      _
    $region13: #{tpu_custom_call.1} parent=1 // pred_fallthru
      _
    // Predicated region
    $region14: #{tpu_custom_call.1} parent=1 // pred_check
      _
    $region15: #{tpu_custom_call.1} parent=1 // pred_check_branch
      %24 = sbr.rel (0) target = $region17
    $region16: #{tpu_custom_call.1} parent=1 // pred_region
      _
    $region17: #{tpu_custom_call.1} parent=1 // pred_fallthru
      _
    // Predicated region
    $region18: #{tpu_custom_call.1} parent=1 // pred_check
      _
    $region19: #{tpu_custom_call.1} parent=1 // pred_check_branch
      %26 = sbr.rel (0) target = $region21
    $region20: #{tpu_custom_call.1} parent=1 // pred_region
      _
    $region21: #{tpu_custom_call.1} parent=1 // pred_fallthru
      _
    // Predicated region
    $region22: #{tpu_custom_call.1} parent=1 // pred_check
      _
    $region23: #{tpu_custom_call.1} parent=1 // pred_check_branch
      %28 = sbr.rel (0) target = $region25
    $region24: #{tpu_custom_call.1} parent=1 // pred_region
      _
    $region25: #{tpu_custom_call.1} parent=1 // pred_fallthru
      _
    // Predicated region
    $region26: #{tpu_custom_call.1} parent=1 // pred_check
      _
    $region27: #{tpu_custom_call.1} parent=1 // pred_check_branch
      %30 = sbr.rel (0) target = $region29
    $region28: #{tpu_custom_call.1} parent=1 // pred_region
      _
    $region29: #{tpu_custom_call.1} parent=1 // pred_fallthru
      _
    // Predicated region
    $region30: #{tpu_custom_call.1} parent=1 // pred_check
      _
    $region31: #{tpu_custom_call.1} parent=1 // pred_check_branch
      %32 = sbr.rel (0) target = $region33
    $region32: #{tpu_custom_call.1} parent=1 // pred_region
      _
    $region33: #{tpu_custom_call.1} parent=1 // pred_fallthru
      _
    // Predicated region
    $region34: #{tpu_custom_call.1} parent=1 // pred_check
      _
    $region35: #{tpu_custom_call.1} parent=1 // pred_check_branch
      %34 = sbr.rel (0) target = $region37
    $region36: #{tpu_custom_call.1} parent=1 // pred_region
      _
    $region37: #{tpu_custom_call.1} parent=1 // pred_fallthru
      _
    %v35 = vld [vmem:[%s0] sm:$0xf]
    %v36 = vld [vmem:[%s1] sm:$0xff]
    %v37 = vld [vmem:[%s1 + $0x8] sm:$0xff]
    %v38 = vld [vmem:[%s1 + $0x10] sm:$0xff]
    %v39 = vld [vmem:[%s1 + $0x18] sm:$0xff]
    %v40 = vld [vmem:[%s1 + $0x20] sm:$0xff]
    %v41 = vld [vmem:[%s1 + $0x28] sm:$0xff]
    %v42 = vld [vmem:[%s1 + $0x30] sm:$0xff]
    %v43 = vld [vmem:[%s1 + $0x38] sm:$0xff]
    %v44 = vld [vmem:[%s2] sm:$0xff]
    %v45 = vld [vmem:[%s2 + $0x8] sm:$0xff]
    %v46 = vld [vmem:[%s2 + $0x10] sm:$0xff]
    %v47 = vld [vmem:[%s2 + $0x18] sm:$0xff]
    %v48 = vld [vmem:[%s2 + $0x20] sm:$0xff]
    %v49 = vld [vmem:[%s2 + $0x28] sm:$0xff]
    %v50 = vld [vmem:[%s2 + $0x30] sm:$0xff]
    %v51 = vld [vmem:[%s2 + $0x38] sm:$0xff]
    %53 = vset.pattern.permute.xlu0 0
    %54 = vperm.xlu0 %53, %v44
    %v55 = vpop.permute.xlu0 %54
    %58 = vset.pattern.permute.xlu0 0
    %59 = vperm.xlu0 %58, %v45
    %v60 = vpop.permute.xlu0 %59
    %63 = vset.pattern.permute.xlu0 0
    %64 = vperm.xlu0 %63, %v46
    %v65 = vpop.permute.xlu0 %64
    %68 = vset.pattern.permute.xlu0 0
    %69 = vperm.xlu0 %68, %v47
    %v70 = vpop.permute.xlu0 %69
    %73 = vset.pattern.permute.xlu0 0
    %74 = vperm.xlu0 %73, %v48
    %v75 = vpop.permute.xlu0 %74
    %78 = vset.pattern.permute.xlu0 0
    %79 = vperm.xlu0 %78, %v49
    %v80 = vpop.permute.xlu0 %79
    %83 = vset.pattern.permute.xlu0 0
    %84 = vperm.xlu0 %83, %v50
    %v85 = vpop.permute.xlu0 %84
    %88 = vset.pattern.permute.xlu0 0
    %89 = vperm.xlu0 %88, %v51
    %v90 = vpop.permute.xlu0 %89
    %vm92 = vcmask 31744
    %v94 = vsel %vm92, %v36, 0
    %v97 = vsel %vm92, %v37, 0
    %v100 = vsel %vm92, %v38, 0
    %v103 = vsel %vm92, %v39, 0
    %v106 = vsel %vm92, %v40, 0
    %v109 = vsel %vm92, %v41, 0
    %v112 = vsel %vm92, %v42, 0
    %v115 = vsel %vm92, %v43, 0
    %vm117 = vcmask 1043456
    %v119 = vsel %vm117, %v35, 0
    %121 = vmatpush.msra.mxu0 0.0
    %122 = vmatpush.msra.mxu0 0.0
    %123 = vmatpush.msra.mxu0 0.0
    %124 = vmatpush.msra.mxu0 0.0
    %125 = vmatpush.msra.mxu0 0.0
    %126 = vmatpush.msra.mxu0 0.0
    %127 = vmatpush.msra.mxu0 0.0
    %128 = vmatpush.msra.mxu0 0.0
    %129 = vmatpush.msra.mxu0 0.0
    %130 = vmatpush.msra.mxu0 0.0
    %131 = vmatpush.msra.mxu0 0.0
    %132 = vmatpush.msra.mxu0 0.0
    %133 = vmatpush.msra.mxu0 0.0
    %134 = vmatpush.msra.mxu0 0.0
    %135 = vmatpush.msra.mxu0 0.0
    %136 = vmatpush.msra.mxu0 %v119
    %137 = vmatmul.f32.gmra.mxu0 %v94
    %v138 = vpop.f32.mrf.mxu0
    %v139 = vadd.f32 %v55, %v138
    %140 = vmatmul.f32.gmra.mxu0 %v97
    %v141 = vpop.f32.mrf.mxu0
    %v142 = vadd.f32 %v60, %v141
    %143 = vmatmul.f32.gmra.mxu0 %v100
    %v144 = vpop.f32.mrf.mxu0
    %v145 = vadd.f32 %v65, %v144
    %146 = vmatmul.f32.gmra.mxu0 %v103
    %v147 = vpop.f32.mrf.mxu0
    %v148 = vadd.f32 %v70, %v147
    %149 = vmatmul.f32.gmra.mxu0 %v106
    %v150 = vpop.f32.mrf.mxu0
    %v151 = vadd.f32 %v75, %v150
    %152 = vmatmul.f32.gmra.mxu0 %v109
    %v153 = vpop.f32.mrf.mxu0
    %v154 = vadd.f32 %v80, %v153
    %155 = vmatmul.f32.gmra.mxu0 %v112
    %v156 = vpop.f32.mrf.mxu0
    %v157 = vadd.f32 %v85, %v156
    %158 = vmatmul.f32.gmra.mxu0 %v115
    %v159 = vpop.f32.mrf.mxu0
    %v160 = vadd.f32 %v90, %v159
    %161 = vdwg.mxu0
    %v162 = vmax.f32 %v139, 0.0
    %v163 = vmax.f32 %v142, 0.0
    %v164 = vmax.f32 %v145, 0.0
    %v165 = vmax.f32 %v148, 0.0
    %v166 = vmax.f32 %v151, 0.0
    %v167 = vmax.f32 %v154, 0.0
    %v168 = vmax.f32 %v157, 0.0
    %v169 = vmax.f32 %v160, 0.0
    %v170 = vld [vmem:[%s3] sm:$0xff]
    %v171 = vld [vmem:[%s3 + $0x8] sm:$0xff]
    %v172 = vld [vmem:[%s3 + $0x10] sm:$0xff]
    %v173 = vld [vmem:[%s3 + $0x18] sm:$0xff]
    %v174 = vld [vmem:[%s4] sm:$0xff]
    %v175 = vld [vmem:[%s4 + $0x8] sm:$0xff]
    %v176 = vld [vmem:[%s4 + $0x10] sm:$0xff]
    %v177 = vld [vmem:[%s4 + $0x18] sm:$0xff]
    %179 = vset.pattern.permute.xlu0 0
    %180 = vperm.xlu0 %179, %v174
    %v181 = vpop.permute.xlu0 %180
    %184 = vset.pattern.permute.xlu0 0
    %185 = vperm.xlu0 %184, %v175
    %v186 = vpop.permute.xlu0 %185
    %189 = vset.pattern.permute.xlu0 0
    %190 = vperm.xlu0 %189, %v176
    %v191 = vpop.permute.xlu0 %190
    %194 = vset.pattern.permute.xlu0 0
    %195 = vperm.xlu0 %194, %v177
    %v196 = vpop.permute.xlu0 %195
    %vm198 = vcmask 523264
    %v200 = vsel %vm198, %v170, 0
    %v203 = vsel %vm198, %v171, 0
    %v206 = vsel %vm198, %v172, 0
    %v209 = vsel %vm198, %v173, 0
    %211 = vmatpush.msra.mxu0 0.0
    %212 = vmatpush.msra.mxu0 0.0
    %213 = vmatpush.msra.mxu0 0.0
    %214 = vmatpush.msra.mxu0 0.0
    %215 = vmatpush.msra.mxu0 0.0
    %216 = vmatpush.msra.mxu0 0.0
    %217 = vmatpush.msra.mxu0 0.0
    %218 = vmatpush.msra.mxu0 0.0
    %219 = vmatpush.msra.mxu0 %v169
    %220 = vmatpush.msra.mxu0 %v168
    %221 = vmatpush.msra.mxu0 %v167
    %222 = vmatpush.msra.mxu0 %v166
    %223 = vmatpush.msra.mxu0 %v165
    %224 = vmatpush.msra.mxu0 %v164
    %225 = vmatpush.msra.mxu0 %v163
    %226 = vmatpush.msra.mxu0 %v162
    %227 = vmatmul.f32.gmra.mxu0 %v200
    %v228 = vpop.f32.mrf.mxu0
    %v229 = vadd.f32 %v181, %v228
    %230 = vmatmul.f32.gmra.mxu0 %v203
    %v231 = vpop.f32.mrf.mxu0
    %v232 = vadd.f32 %v186, %v231
    %233 = vmatmul.f32.gmra.mxu0 %v206
    %v234 = vpop.f32.mrf.mxu0
    %v235 = vadd.f32 %v191, %v234
    %236 = vmatmul.f32.gmra.mxu0 %v209
    %v237 = vpop.f32.mrf.mxu0
    %v238 = vadd.f32 %v196, %v237
    %239 = vdwg.mxu0
    %v240 = vmax.f32 %v229, 0.0
    %v241 = vmax.f32 %v232, 0.0
    %v242 = vmax.f32 %v235, 0.0
    %v243 = vmax.f32 %v238, 0.0
    %v244 = vld [vmem:[%s5] sm:$0xff]
    %v245 = vld [vmem:[%s5 + $0x8] sm:$0xff]
    %v246 = vld [vmem:[%s6] sm:$0xff]
    %v247 = vld [vmem:[%s6 + $0x8] sm:$0xff]
    %249 = vset.pattern.permute.xlu0 0
    %250 = vperm.xlu0 %249, %v246
    %v251 = vpop.permute.xlu0 %250
    %254 = vset.pattern.permute.xlu0 0
    %255 = vperm.xlu0 %254, %v247
    %v256 = vpop.permute.xlu0 %255
    %vm258 = vcmask 261120
    %v260 = vsel %vm258, %v244, 0
    %v263 = vsel %vm258, %v245, 0
    %265 = vmatpush.msra.mxu0 0.0
    %266 = vmatpush.msra.mxu0 0.0
    %267 = vmatpush.msra.mxu0 0.0
    %268 = vmatpush.msra.mxu0 0.0
    %269 = vmatpush.msra.mxu0 0.0
    %270 = vmatpush.msra.mxu0 0.0
    %271 = vmatpush.msra.mxu0 0.0
    %272 = vmatpush.msra.mxu0 0.0
    %273 = vmatpush.msra.mxu0 0.0
    %274 = vmatpush.msra.mxu0 0.0
    %275 = vmatpush.msra.mxu0 0.0
    %276 = vmatpush.msra.mxu0 0.0
    %277 = vmatpush.msra.mxu0 %v243
    %278 = vmatpush.msra.mxu0 %v242
    %279 = vmatpush.msra.mxu0 %v241
    %280 = vmatpush.msra.mxu0 %v240
    %281 = vmatmul.f32.gmra.mxu0 %v260
    %v282 = vpop.f32.mrf.mxu0
    %v283 = vadd.f32 %v251, %v282
    %284 = vmatmul.f32.gmra.mxu0 %v263
    %v285 = vpop.f32.mrf.mxu0
    %v286 = vadd.f32 %v256, %v285
    %287 = vdwg.mxu0
    %v288 = vmax.f32 %v283, 0.0
    %v289 = vmax.f32 %v286, 0.0
    %v290 = vld [vmem:[%s7] sm:$0xff]
    %v291 = vld [vmem:[%s7 + $0x8] sm:$0xff]
    %293 = vset.pattern.permute.xlu0 0
    %294 = vperm.xlu0 %293, %v290
    %v295 = vpop.permute.xlu0 %294
    %298 = vset.pattern.permute.xlu0 0
    %299 = vperm.xlu0 %298, %v291
    %v300 = vpop.permute.xlu0 %299
    %v302 = vmul.f32 %v288, %v295
    %v303 = vmul.f32 %v289, %v300
    %v304 = vadd.f32 %v302, %v303
    %v305 = vrot.slane %v304, 4
    %v306 = vadd.f32 %v304, %v305
    %v307 = vrot.slane %v306, 2
    %v308 = vadd.f32 %v306, %v307
    %v309 = vrot.slane %v308, 1
    %v310 = vadd.f32 %v308, %v309
    %v311 = vld [vmem:[#allocation2] sm:$0x1]
    %313 = vset.pattern.permute.xlu0 0
    %314 = vperm.xlu0 %313, %v311
    %v315 = vpop.permute.xlu0 %314
    %v317 = vperm.slane %v315, 0
    %v318 = vadd.f32 %v310, %v317
    %319 = vst [vmem:[#allocation3] sm:$0x1] %v318
    // Predicated region
    $region38: #{tpu_custom_call.1} parent=1 // pred_check
      _
    $region39: #{tpu_custom_call.1} parent=1 // pred_check_branch
      %321 = sbr.rel (0) target = $region41
    $region40: #{tpu_custom_call.1} parent=1 // pred_region
      %323 = vsyncadd [#allocation4], 0
      %s325 = sshll.u32 [#allocation3], 4
      %s326 = int_to_ptr.vmem [resolvable:$true] %s325
      %s327 = sshll.u32 %s9, 4
      %s328 = int_to_ptr.hbm [resolvable:$true] %s327
      %330 = dma.vmem_to_hbm [thread:$0]  %s326, 16, %s328, [#allocation4]
    $region41: #{tpu_custom_call.1} parent=1 // pred_fallthru
      _
    // Predicated region
    $region42: #{tpu_custom_call.1} parent=1 // pred_check
      _
    $region43: #{tpu_custom_call.1} parent=1 // pred_check_branch
      %332 = sbr.rel (0) target = $region45
    $region44: #{tpu_custom_call.1} parent=1 // pred_region
      %334 = dma.done [#allocation4], 16
    $region45: #{tpu_custom_call.1} parent=1 // pred_fallthru
      _
    %335 = vsyncpa [#allocation4], 1

</llo_original>
